<compile_context>
chip_gen: v7x
topology: tpu7x:2x2x1
jax: 0.10.0
libtpu: 0.0.40
codegen_flags: <defaults>
</compile_context>

<pallas_src>
import jax
import jax.numpy as jnp
from jax.experimental import pallas as pl
from jax.experimental.pallas import tpu as pltpu

_LANES = 128


def _make_rmse_partial_kernel(n_valid, need_bounds):
    """Kernel factory; n_valid (true flat element count) is a static int.

    Per grid step: masked sum of squared residuals + valid count over one
    (tr, 128) tile.  Outputs are lane-dense (1, 1, 128) partial blocks.
    """
    rows_full = n_valid // _LANES      # rows that are entirely in-bounds
    lane_tail = n_valid % _LANES       # valid lanes in row `rows_full`

    def kernel(p_ref, t_ref, ssq_ref, cnt_ref):
        p = p_ref[...].astype(jnp.float32)       # upcast in-kernel (no wrapper cast pass)
        t = t_ref[...].astype(jnp.float32)
        valid = t == t                           # non-NaN targets

        if need_bounds:
            # Mask wrapper padding and Pallas partial-last-block padding by
            # global row/lane index (values in the padded region are arbitrary).
            tr = p_ref.shape[0]
            row0 = pl.program_id(0) * tr
            rid = jax.lax.broadcasted_iota(jnp.int32, (tr, _LANES), 0) + row0
            in_bounds = rid < rows_full
            if lane_tail:
                cid = jax.lax.broadcasted_iota(jnp.int32, (tr, _LANES), 1)
                in_bounds = in_bounds | ((rid == rows_full) & (cid < lane_tail))
            valid = valid & in_bounds

        d = jnp.where(valid, p - t, 0.0)         # single masked elementwise pass
        ssq = jnp.sum(d * d)
        cnt = jnp.sum(valid.astype(jnp.float32))  # <= tr*128 per tile: exact in f32

        ssq_ref[...] = jnp.broadcast_to(ssq, (1, 1, _LANES))
        cnt_ref[...] = jnp.broadcast_to(cnt.astype(jnp.int32), (1, 1, _LANES))

    return kernel


def _choose_tile(rows, tile_rows, align):
    """Tile height: as big as tile_rows, but keep >= ~4 grid steps for
    mid-sized inputs so v7x's two TensorCores / the DMA pipeline get depth."""
    if rows <= tile_rows:
        return rows                               # one full-extent block (always legal)
    tr = tile_rows
    if rows < 4 * tr:
        tr = -(-rows // 4)
    tr = -(-tr // align) * align                  # sublane / dtype-packing alignment
    return min(tr, tile_rows)


def _masked_rmse_sums(p0, t0, tile_rows=8192):
    """Returns (sum of masked squared residuals [f32], count of valid targets [i32])."""
    p = p0.reshape(-1)                            # native dtype; upcast happens in-kernel
    t = t0.reshape(-1)
    n = int(p.shape[0])
    if n == 0:
        return jnp.float32(0.0), jnp.int32(0)

    rows = -(-n // _LANES)                        # cdiv: number of 128-lane rows
    pad = rows * _LANES - n
    if pad:
        # Only when n is not a multiple of 128 (the lane-dense reshape needs it).
        # Pad value is irrelevant: the kernel bounds-masks every index >= n.
        p = jnp.pad(p, (0, pad))
        t = jnp.pad(t, (0, pad))
    p2 = p.reshape(rows, _LANES)
    t2 = t.reshape(rows, _LANES)

    # bf16 packs 2 rows / sublane, int8 packs 4 -> keep tiles (16|32)-row aligned.
    min_item = min(p2.dtype.itemsize, t2.dtype.itemsize)
    align = 8 * max(1, 4 // max(1, min_item))
    tr = _choose_tile(rows, int(tile_rows), align)
    g = -(-rows // tr)
    need_bounds = (pad != 0) or (rows % tr != 0)  # any padded / partial-block region?

    kernel = _make_rmse_partial_kernel(n, need_bounds)

    # Double-buffered inputs + headroom; >=16 MiB, <=48 MiB (v7x physical is 64 MiB).
    in_bytes_per_step = tr * _LANES * (p2.dtype.itemsize + t2.dtype.itemsize)
    vmem_limit = int(min(max(2 * in_bytes_per_step + (4 << 20), 16 << 20), 48 << 20))

    cost = pl.CostEstimate(
        flops=6 * rows * _LANES,
        transcendentals=0,
        bytes_accessed=rows * _LANES * (p2.dtype.itemsize + t2.dtype.itemsize)
        + 2 * g * _LANES * 4,
    )

    ssq_parts, cnt_parts = pl.pallas_call(
        kernel,
        out_shape=(
            jax.ShapeDtypeStruct((g, 1, _LANES), jnp.float32),
            jax.ShapeDtypeStruct((g, 1, _LANES), jnp.int32),
        ),
        grid_spec=pltpu.PrefetchScalarGridSpec(
            num_scalar_prefetch=0,
            grid=(g,),
            in_specs=[
                pl.BlockSpec((tr, _LANES), lambda i: (i, 0)),
                pl.BlockSpec((tr, _LANES), lambda i: (i, 0)),
            ],
            out_specs=(
                pl.BlockSpec((1, 1, _LANES), lambda i: (i, 0, 0)),
                pl.BlockSpec((1, 1, _LANES), lambda i: (i, 0, 0)),
            ),
        ),
        compiler_params=pltpu.CompilerParams(
            dimension_semantics=("parallel",),     # shards streaming over v7x's 2 TCs
            vmem_limit_bytes=vmem_limit,
        ),
        cost_estimate=cost,
    )(p2, t2)

    total_sq = jnp.sum(ssq_parts[:, 0, 0])         # g values; f32 is plenty here
    total_cnt = jnp.sum(cnt_parts[:, 0, 0])        # exact int32 count
    return total_sq, total_cnt


def rmse_loss_ann(output, target, get_length=False, tile_rows=8192):
    """Pallas implementation of RmseLossANN.forward.

    output, target : (N, ny) or (nt, nb, ny); only variable 0 is used.
    If every channel-0 target is NaN the result is NaN (0/0), matching torch.
    """
    if output.ndim == 2:
        p0, t0 = output[:, 0], target[:, 0]
    else:
        p0, t0 = output[:, :, 0], target[:, :, 0]
    # TODO(synk): for small ny the channel-0 strided slice could be fused into
    # the kernel (stream the interleaved tensor lane-dense + iota channel mask)
    # to save one more HBM pass; kept as a separate XLA slice for generality.
    total_sq, total_cnt = _masked_rmse_sums(p0, t0, tile_rows)
    loss = jnp.sqrt(total_sq / total_cnt.astype(jnp.float32))
    if get_length:
        return loss, total_cnt
    return loss


def rmse_loss_ann_ref(output, target, get_length=False):
    """Pure-JAX reference (masked reductions instead of boolean gather)."""
    if output.ndim == 2:
        p0, t0 = output[:, 0], target[:, 0]
    else:
        p0, t0 = output[:, :, 0], target[:, :, 0]
    p0 = p0.astype(jnp.float32)
    t0 = t0.astype(jnp.float32)
    mask = ~jnp.isnan(t0)
    diff = jnp.where(mask, p0 - t0, 0.0)
    cnt = jnp.sum(mask)
    loss = jnp.sqrt(jnp.sum(diff * diff) / cnt)
    if get_length:
        return loss, cnt
    return loss


if __name__ == "__main__":
    key = jax.random.PRNGKey(0)
    k1, k2, k3 = jax.random.split(key, 3)

    # --- 3-D path (nt, nb, ny), get_length=True -------------------------------
    nt, nb, ny = 16, 8, 4
    output = jax.random.normal(k1, (nt, nb, ny), jnp.float32)
    target = jax.random.normal(k2, (nt, nb, ny), jnp.float32)
    nan_mask = jax.random.uniform(k3, (nt, nb)) < 0.2
    target = target.at[:, :, 0].set(jnp.where(nan_mask, jnp.nan, target[:, :, 0]))

    loss, nday = rmse_loss_ann(output, target, get_length=True)
    loss = jax.block_until_ready(loss)
    ref_loss, ref_nday = rmse_loss_ann_ref(output, target, get_length=True)
    assert jnp.allclose(loss, ref_loss, rtol=1e-5, atol=1e-6), (loss, ref_loss)
    assert int(nday) == int(ref_nday), (int(nday), int(ref_nday))

    # --- 2-D path (N, ny) ------------------------------------------------------
    out2d = output.reshape(nt * nb, ny)
    tgt2d = target.reshape(nt * nb, ny)
    loss2 = jax.block_until_ready(rmse_loss_ann(out2d, tgt2d))
    ref2 = rmse_loss_ann_ref(out2d, tgt2d)
    assert jnp.allclose(loss2, ref2, rtol=1e-5, atol=1e-6), (loss2, ref2)

    # --- ragged / partial-last-block path (exercises in-kernel bounds masking) -
    N3 = 2500                                 # n=2500: lane tail + partial grid block
    out3 = jax.random.normal(k1, (N3, 2), jnp.float32)
    tgt3 = jax.random.normal(k2, (N3, 2), jnp.float32)
    tgt3 = tgt3.at[::7, 0].set(jnp.nan)
    l3, n3 = rmse_loss_ann(out3, tgt3, get_length=True, tile_rows=8)
    l3 = jax.block_until_ready(l3)
    r3, rn3 = rmse_loss_ann_ref(out3, tgt3, get_length=True)
    assert jnp.allclose(l3, r3, rtol=1e-5, atol=1e-6), (l3, r3)
    assert int(n3) == int(rn3), (int(n3), int(rn3))

    # --- bf16 inputs streamed natively (no wrapper-side f32 cast pass) ---------
    outb = jax.random.normal(k1, (512, 8, 4), jnp.float32).astype(jnp.bfloat16)
    tgtb = jax.random.normal(k2, (512, 8, 4), jnp.float32).astype(jnp.bfloat16)
    nanb = jax.random.uniform(k3, (512, 8)) < 0.3
    tgtb = tgtb.at[:, :, 0].set(jnp.where(nanb, jnp.nan, tgtb[:, :, 0]))
    lb, nb_cnt = rmse_loss_ann(outb, tgtb, get_length=True)
    lb = jax.block_until_ready(lb)
    rb, rnb = rmse_loss_ann_ref(outb, tgtb, get_length=True)
    assert jnp.allclose(lb, rb, rtol=1e-4, atol=1e-5), (lb, rb)
    assert int(nb_cnt) == int(rnb), (int(nb_cnt), int(rnb))

    print("KERNEL_OK")
</pallas_src>

<mosaic_0001>
module attributes {stable_mosaic.version = 11 : i64} {
  func.func @kernel(%arg0: i32, %arg1: memref<1x128xf32, #tpu.memory_space<vmem>>, %arg2: memref<1x128xf32, #tpu.memory_space<vmem>>, %arg3: memref<1x1x128xf32, #tpu.memory_space<vmem>>, %arg4: memref<1x1x128xi32, #tpu.memory_space<vmem>>) attributes {dimension_semantics = [#tpu.dimension_semantics<parallel>], iteration_bounds = array<i64: 1>, scalar_prefetch = 0 : i64, scratch_operands = 0 : i64, tpu.core_type = #tpu.core_type<tc>, window_params = [{transform_indices = @transform_0, window_bounds = array<i64: 1, 128>}, {transform_indices = @transform_1, window_bounds = array<i64: 1, 128>}, {transform_indices = @transform_2, window_bounds = array<i64: 1, 1, 128>}, {transform_indices = @transform_3, window_bounds = array<i64: 1, 1, 128>}]} {
    %c0 = arith.constant 0 : index
    %c0_0 = arith.constant 0 : index
    %0 = vector.load %arg1[%c0, %c0_0] : memref<1x128xf32, #tpu.memory_space<vmem>>, vector<1x128xf32>
    %c0_1 = arith.constant 0 : index
    %c0_2 = arith.constant 0 : index
    %1 = vector.load %arg2[%c0_1, %c0_2] : memref<1x128xf32, #tpu.memory_space<vmem>>, vector<1x128xf32>
    %2 = arith.cmpf oeq, %1, %1 : vector<1x128xf32>
    %3 = arith.subf %0, %1 : vector<1x128xf32>
    %cst = arith.constant 0.000000e+00 : f32
    %4 = vector.broadcast %cst : f32 to vector<1x128xf32>
    %5 = arith.select %2, %3, %4 : vector<1x128xi1>, vector<1x128xf32>
    %6 = arith.mulf %5, %5 : vector<1x128xf32>
    %7 = vector.shape_cast %6 : vector<1x128xf32> to vector<1x1x128xf32>
    %cst_3 = arith.constant dense<0.000000e+00> : vector<1xf32>
    %8 = vector.multi_reduction <add>, %7, %cst_3 [1, 2] : vector<1x1x128xf32> to vector<1xf32>
    %9 = vector.shape_cast %8 : vector<1xf32> to vector<1x1x1xf32>
    %10 = vector.extract %9[0, 0, 0] : f32 from vector<1x1x1xf32>
    %11 = arith.extui %2 : vector<1x128xi1> to vector<1x128xi32>
    %12 = arith.sitofp %11 : vector<1x128xi32> to vector<1x128xf32>
    %13 = vector.shape_cast %12 : vector<1x128xf32> to vector<1x1x128xf32>
    %cst_4 = arith.constant dense<0.000000e+00> : vector<1xf32>
    %14 = vector.multi_reduction <add>, %13, %cst_4 [1, 2] : vector<1x1x128xf32> to vector<1xf32>
    %15 = vector.shape_cast %14 : vector<1xf32> to vector<1x1x1xf32>
    %16 = vector.extract %15[0, 0, 0] : f32 from vector<1x1x1xf32>
    %17 = vector.broadcast %10 : f32 to vector<1x1x128xf32>
    %c0_5 = arith.constant 0 : index
    %c0_6 = arith.constant 0 : index
    %c0_7 = arith.constant 0 : index
    %18 = vector.load %arg3[%c0_5, %c0_6, %c0_7] : memref<1x1x128xf32, #tpu.memory_space<vmem>>, vector<1x1x128xf32>
    tpu.vector_store %arg3[%c0_5, %c0_6, %c0_7], %17 {strides = array<i32>} : memref<1x1x128xf32, #tpu.memory_space<vmem>>, vector<1x1x128xf32>,
    %19 = arith.fptosi %16 : f32 to i32
    %20 = vector.broadcast %19 : i32 to vector<1x1x128xi32>
    %c0_8 = arith.constant 0 : index
    %c0_9 = arith.constant 0 : index
    %c0_10 = arith.constant 0 : index
    %21 = vector.load %arg4[%c0_8, %c0_9, %c0_10] : memref<1x1x128xi32, #tpu.memory_space<vmem>>, vector<1x1x128xi32>
    tpu.vector_store %arg4[%c0_8, %c0_9, %c0_10], %20 {strides = array<i32>} : memref<1x1x128xi32, #tpu.memory_space<vmem>>, vector<1x1x128xi32>,
    return
  }
  func.func @transform_0(%arg0: i32) -> (i32, i32) {
    %c0_i32 = arith.constant 0 : i32
    %c0_i32_0 = arith.constant 0 : i32
    return %arg0, %c0_i32 : i32, i32
  }
  func.func @transform_1(%arg0: i32) -> (i32, i32) {
    %c0_i32 = arith.constant 0 : i32
    %c0_i32_0 = arith.constant 0 : i32
    return %arg0, %c0_i32 : i32, i32
  }
  func.func @transform_2(%arg0: i32) -> (i32, i32, i32) {
    %c0_i32 = arith.constant 0 : i32
    %c0_i32_0 = arith.constant 0 : i32
    %c0_i32_1 = arith.constant 0 : i32
    return %arg0, %c0_i32, %c0_i32_0 : i32, i32, i32
  }
  func.func @transform_3(%arg0: i32) -> (i32, i32, i32) {
    %c0_i32 = arith.constant 0 : i32
    %c0_i32_0 = arith.constant 0 : i32
    %c0_i32_1 = arith.constant 0 : i32
    return %arg0, %c0_i32, %c0_i32_0 : i32, i32, i32
  }
}

</mosaic_0001>

<llo_original>
// kernel: tpu_custom_call.1
$region0: #{tpu_custom_call.1}
  #allocation0 [shape = 'u32[]', space=smem, size = 0x4, offset = 0x4, fixed_abs, tag = 'smem constant byte address 0x4 - core index']
  #allocation1 [shape = 'u32[144,128]{1,0:T(1,128)}', space=vmem, size = 0x12000, scoped, tag = 'internal scratch']
  %s0 = inlined_call_operand.hbm [shape: f32[1,128], index: 0, kind: input, shape index: {}]
  %s1 = inlined_call_operand.vmem [shape: f32[1,128], index: 1, kind: input, shape index: {}]
  %s2 = inlined_call_operand.hbm [shape: f32[1,1,128], index: 2, kind: output, shape index: {0}]
  %s3 = inlined_call_operand.hbm [shape: s32[1,1,128], index: 3, kind: output, shape index: {1}]
  %4 = xla_tuple %s2, %s3
  %s5 = sld [smem:[#allocation0]]
  $region30: #{tpu_custom_call.1} parent=0
    _
  %s7 = ssub.s32 1, %s5
  %s8 = scalar_select 0, %s7, %s5
  $region1: #{tpu_custom_call.1} parent=0
    #allocation2 [shape = 'u8[512]{0}', space=vmem, size = 0x400, scoped, tag = 'input window, operand 0, single buffered']
    #allocation3 [shape = 's32[1]{0}', space=sflag, size = 0x4, scoped, tag = 'scoped memory for tpu_custom_call.1']
    #allocation4 [shape = 's32[1]{0}', space=sflag, size = 0x4, scoped, tag = 'scoped memory for tpu_custom_call.1']
    #allocation5 [shape = 'u8[512]{0}', space=vmem, size = 0x400, scoped, tag = 'output window, operand 0, single buffered']
    #allocation6 [shape = 'u8[512]{0}', space=vmem, size = 0x400, scoped, tag = 'output window, operand 1, single buffered']
    #allocation7 [shape = 's32[1]{0}', space=sflag, size = 0x4, scoped, tag = 'scoped memory for tpu_custom_call.1']
    %9 = vsyncpa [#allocation3], 0
    %10 = vsyncpa [#allocation4], 0
    %11 = vsyncpa [#allocation7], 0
    // Predicated region
    $region2: #{tpu_custom_call.1} parent=1 // pred_check
      _
    $region3: #{tpu_custom_call.1} parent=1 // pred_check_branch
      %13 = sbr.rel (0) target = $region5
    $region4: #{tpu_custom_call.1} parent=1 // pred_region
      %s15 = ssub.s32 16, 16
      %16 = vsyncadd [#allocation3], %s15
      %s18 = sshll.u32 [#allocation2], 4
      %s19 = int_to_ptr.vmem [resolvable:$true] %s18
      %21 = dma.hbm_to_vmem [thread:$0]  %s0, 16, %s19, [#allocation3]
    $region5: #{tpu_custom_call.1} parent=1 // pred_fallthru
      _
    // Predicated region
    $region6: #{tpu_custom_call.1} parent=1 // pred_check
      _
    $region7: #{tpu_custom_call.1} parent=1 // pred_check_branch
      %23 = sbr.rel (0) target = $region9
    $region8: #{tpu_custom_call.1} parent=1 // pred_region
      _
    $region9: #{tpu_custom_call.1} parent=1 // pred_fallthru
      _
    // Predicated region
    $region10: #{tpu_custom_call.1} parent=1 // pred_check
      _
    $region11: #{tpu_custom_call.1} parent=1 // pred_check_branch
      %25 = sbr.rel (0) target = $region13
    $region12: #{tpu_custom_call.1} parent=1 // pred_region
      %26 = dma.done [#allocation3], 16
    $region13: #{tpu_custom_call.1} parent=1 // pred_fallthru
      _
    %v27 = vld [vmem:[#allocation2] sm:$0x1]
    %v28 = vld [vmem:[%s1] sm:$0x1]
    %vm29 = vcmp.eq.f32.partialorder %v28, %v28
    %v30 = vsub.f32 %v27, %v28
    %v31 = vsel %vm29, %v30, 0.0
    %v32 = vmul.f32 %v31, %v31
    %vm33 = vcmask 1040384
    %v34 = vsel %vm33, %v32, 0.0
    %35 = vadd.xlane.f32.xlu0 %v34
    %v36 = vpop.xlane.xlu0 %35
    %v37 = vrot.slane %v36, 4
    %v38 = vadd.f32 %v36, %v37
    %v39 = vrot.slane %v38, 2
    %v40 = vadd.f32 %v38, %v39
    %v41 = vrot.slane %v40, 1
    %v42 = vadd.f32 %v40, %v41
    %s43 = vtos %v42
    %v44 = vsel %vm29, 1, 0
    %v45 = vcvt.s32.f32 %v44
    %v46 = vsel %vm33, %v45, 0.0
    %47 = vadd.xlane.f32.xlu0 %v46
    %v48 = vpop.xlane.xlu0 %47
    %v49 = vrot.slane %v48, 4
    %v50 = vadd.f32 %v48, %v49
    %v51 = vrot.slane %v50, 2
    %v52 = vadd.f32 %v50, %v51
    %v53 = vrot.slane %v52, 1
    %v54 = vadd.f32 %v52, %v53
    %s55 = vtos %v54
    %v56 = vstv %s43
    %57 = vst [vmem:[#allocation5] sm:$0x1] %v56
    %s58 = scvt.f32.s32.to.zero.pseudo %s55
    %v59 = vstv %s58
    %60 = vst [vmem:[#allocation6] sm:$0x1] %v59
    // Predicated region
    $region14: #{tpu_custom_call.1} parent=1 // pred_check
      _
    $region15: #{tpu_custom_call.1} parent=1 // pred_check_branch
      %62 = sbr.rel (0) target = $region17
    $region16: #{tpu_custom_call.1} parent=1 // pred_region
      %s64 = ssub.s32 16, 16
      %65 = vsyncadd [#allocation4], %s64
      %s67 = sshll.u32 [#allocation5], 4
      %s68 = int_to_ptr.vmem [resolvable:$true] %s67
      %70 = dma.vmem_to_hbm [thread:$0]  %s68, 16, %s2, [#allocation4]
    $region17: #{tpu_custom_call.1} parent=1 // pred_fallthru
      _
    // Predicated region
    $region18: #{tpu_custom_call.1} parent=1 // pred_check
      _
    $region19: #{tpu_custom_call.1} parent=1 // pred_check_branch
      %72 = sbr.rel (0) target = $region21
    $region20: #{tpu_custom_call.1} parent=1 // pred_region
      %s74 = ssub.s32 16, 16
      %75 = vsyncadd [#allocation7], %s74
      %s77 = sshll.u32 [#allocation6], 4
      %s78 = int_to_ptr.vmem [resolvable:$true] %s77
      %80 = dma.vmem_to_hbm [thread:$0]  %s78, 16, %s3, [#allocation7]
    $region21: #{tpu_custom_call.1} parent=1 // pred_fallthru
      _
    // Predicated region
    $region22: #{tpu_custom_call.1} parent=1 // pred_check
      _
    $region23: #{tpu_custom_call.1} parent=1 // pred_check_branch
      %82 = sbr.rel (0) target = $region25
    $region24: #{tpu_custom_call.1} parent=1 // pred_region
      %83 = dma.done [#allocation4], 16
    $region25: #{tpu_custom_call.1} parent=1 // pred_fallthru
      _
    // Predicated region
    $region26: #{tpu_custom_call.1} parent=1 // pred_check
      _
    $region27: #{tpu_custom_call.1} parent=1 // pred_check_branch
      %85 = sbr.rel (0) target = $region29
    $region28: #{tpu_custom_call.1} parent=1 // pred_region
      %86 = dma.done [#allocation7], 16
    $region29: #{tpu_custom_call.1} parent=1 // pred_fallthru
      _
    %87 = vsyncpa [#allocation3], 1
    %88 = vsyncpa [#allocation4], 1
    %89 = vsyncpa [#allocation7], 1

</llo_original>
